<compile_context>
chip_gen: v7x
topology: tpu7x:2x2x1
jax: 0.10.0
libtpu: 0.0.40
codegen_flags: <defaults>
</compile_context>

<pallas_src>
import functools
import math

import jax
import jax.numpy as jnp
from jax.experimental import pallas as pl
from jax.experimental.pallas import tpu as pltpu

EPS = 1e-5


# ----------------------------- Pallas kernel -------------------------------

def _layernorm_kernel(x_ref, o_ref, *, alpha, bias, eps, d):
    x = x_ref[...].astype(jnp.float32)                    # (tile_rows, D), full D per block
    # One-pass statistics: sum and sum-of-squares reduce concurrently (XLU),
    # no serial mean -> centered-square dependency.
    s1 = jnp.sum(x, axis=-1, keepdims=True)
    s2 = jnp.sum(x * x, axis=-1, keepdims=True)
    inv_d = 1.0 / d
    mean = s1 * inv_d
    # torch .std() default is the unbiased estimator (divide by N-1).
    # d == 1 is degenerate in torch (NaN); guard only against Python div-by-zero.
    var = (s2 - s1 * s1 * inv_d) * (1.0 / max(d - 1, 1))
    std = jnp.sqrt(jnp.maximum(var, 0.0))                 # clamp tiny negative fp error
    inv = pl.reciprocal(std + eps, approx=True)           # EUP; keeps VALU slots free
    y = (x - mean) * inv
    # Identity alpha/bias are elided at trace time (they are Python scalars).
    if alpha != 1.0:
        y = alpha * y
    if bias != 0.0:
        y = y + bias
    o_ref[...] = y.astype(o_ref.dtype)


# ------------------------------- wrapper ------------------------------------

def _choose_tile_rows(rows, d, itemsize):
    """Pick a sublane-aligned row tile sized from a conservative VMEM budget."""
    if rows <= 8:
        # Whole (tiny) array as a single block; block dim == array dim is always legal.
        return rows
    # On-chip bytes per row at one grid step:
    #   double-buffered input + output (itemsize each) + ~2 live f32 temporaries.
    per_row_bytes = (4 * itemsize + 8) * d
    budget = 40 * 1024 * 1024          # fits the 48 MiB scoped limit; safe on v7x (64 MiB phys)
    t = budget // max(per_row_bytes, 1)
    t = min(t, 4096)                   # multi-MiB blocks already sit on the HBM roofline
    t = max(8, (t // 8) * 8)           # sublane multiple
    # Don't allocate a block much larger than the data.
    t = min(t, ((rows + 7) // 8) * 8)
    # v7x has 2 TensorCores sharing the grid: keep >= 2 grid steps when possible.
    if pl.cdiv(rows, t) < 2:
        t = max(8, ((((rows + 1) // 2) + 7) // 8) * 8)
    return t


def layernorm(x, alpha=1.0, bias=0.0, eps=EPS):
    """LayerNormalization over the last dim; x may have any leading shape."""
    orig_shape = x.shape
    d = orig_shape[-1]
    rows = int(math.prod(orig_shape[:-1])) if len(orig_shape) > 1 else 1
    x2d = x.reshape(rows, d)

    itemsize = jnp.dtype(x.dtype).itemsize
    tile_rows = _choose_tile_rows(rows, d, itemsize)
    grid = (pl.cdiv(rows, tile_rows),)   # partial last block is masked by Pallas;
                                         # rows are independent so OOB rows are harmless

    # TODO(synk): for production shapes prefer a 128-multiple feature dim D
    # (non-128 last dims fall back to masked partial stores and waste lanes).
    out = pl.pallas_call(
        functools.partial(_layernorm_kernel, alpha=alpha, bias=bias, eps=eps, d=d),
        grid=grid,
        in_specs=[pl.BlockSpec((tile_rows, d), lambda i: (i, 0))],
        out_specs=pl.BlockSpec((tile_rows, d), lambda i: (i, 0)),
        out_shape=jax.ShapeDtypeStruct((rows, d), x.dtype),
        compiler_params=pltpu.CompilerParams(
            dimension_semantics=("parallel",),
            vmem_limit_bytes=48 * 1024 * 1024),
    )(x2d)

    return out.reshape(orig_shape)


# ------------------------------ reference -----------------------------------

def layernorm_ref(x, alpha=1.0, bias=0.0, eps=EPS):
    x = x.astype(jnp.float32)
    mean = jnp.mean(x, axis=-1, keepdims=True)
    xc = x - mean
    var = jnp.sum(xc * xc, axis=-1, keepdims=True) / (x.shape[-1] - 1)
    std = jnp.sqrt(var)
    return alpha * xc / (std + eps) + bias


# --------------------------------- main --------------------------------------

if __name__ == "__main__":
    key = jax.random.PRNGKey(0)
    k1, k2 = jax.random.split(key)

    # Primary case: lane-dense feature dim (multiple of 128).
    x1 = jax.random.normal(k1, (2, 8, 128), jnp.float32)
    y1 = layernorm(x1)
    jax.block_until_ready(y1)
    assert y1.shape == x1.shape and y1.dtype == x1.dtype
    assert jnp.allclose(y1, layernorm_ref(x1), rtol=1e-2, atol=1e-2)

    # Ragged case: rows not a tile multiple (masked partial block) and D != 128k.
    x2 = jax.random.normal(k2, (3, 5, 96), jnp.float32)
    y2 = layernorm(x2)
    jax.block_until_ready(y2)
    assert y2.shape == x2.shape
    assert jnp.allclose(y2, layernorm_ref(x2), rtol=1e-2, atol=1e-2)

    print("KERNEL_OK")
</pallas_src>

<mosaic_0001>
module attributes {stable_mosaic.version = 11 : i64} {
  func.func @_layernorm_kernel(%arg0: i32, %arg1: memref<8x128xf32, #tpu.memory_space<vmem>>, %arg2: memref<8x128xf32, #tpu.memory_space<vmem>>) attributes {dimension_semantics = [#tpu.dimension_semantics<parallel>], iteration_bounds = array<i64: 2>, scalar_prefetch = 0 : i64, scratch_operands = 0 : i64, tpu.core_type = #tpu.core_type<tc>, window_params = [{transform_indices = @transform_0, window_bounds = array<i64: 8, 128>}, {transform_indices = @transform_1, window_bounds = array<i64: 8, 128>}]} {
    %c0 = arith.constant 0 : index
    %c0_0 = arith.constant 0 : index
    %0 = vector.load %arg1[%c0, %c0_0] : memref<8x128xf32, #tpu.memory_space<vmem>>, vector<8x128xf32>
    %cst = arith.constant dense<0.000000e+00> : vector<8xf32>
    %1 = vector.multi_reduction <add>, %0, %cst [1] : vector<8x128xf32> to vector<8xf32>
    %2 = vector.shape_cast %1 : vector<8xf32> to vector<8x1xf32>
    %3 = arith.mulf %0, %0 : vector<8x128xf32>
    %cst_1 = arith.constant dense<0.000000e+00> : vector<8xf32>
    %4 = vector.multi_reduction <add>, %3, %cst_1 [1] : vector<8x128xf32> to vector<8xf32>
    %5 = vector.shape_cast %4 : vector<8xf32> to vector<8x1xf32>
    %cst_2 = arith.constant 7.812500e-03 : f32
    %6 = vector.broadcast %cst_2 : f32 to vector<8x1xf32>
    %7 = arith.mulf %2, %6 : vector<8x1xf32>
    %8 = arith.mulf %2, %2 : vector<8x1xf32>
    %cst_3 = arith.constant 7.812500e-03 : f32
    %9 = vector.broadcast %cst_3 : f32 to vector<8x1xf32>
    %10 = arith.mulf %8, %9 : vector<8x1xf32>
    %11 = arith.subf %5, %10 : vector<8x1xf32>
    %cst_4 = arith.constant 0.00787401571 : f32
    %12 = vector.broadcast %cst_4 : f32 to vector<8x1xf32>
    %13 = arith.mulf %11, %12 : vector<8x1xf32>
    %cst_5 = arith.constant 0.000000e+00 : f32
    %14 = vector.broadcast %cst_5 : f32 to vector<8x1xf32>
    %15 = arith.maximumf %13, %14 : vector<8x1xf32>
    %16 = math.sqrt %15 : vector<8x1xf32>
    %cst_6 = arith.constant 9.99999974E-6 : f32
    %17 = vector.broadcast %cst_6 : f32 to vector<8x1xf32>
    %18 = arith.addf %16, %17 : vector<8x1xf32>
    %19 = tpu.reciprocal %18 {approx = true} : vector<8x1xf32> -> vector<8x1xf32>
    %20 = vector.broadcast %7 : vector<8x1xf32> to vector<8x128xf32>
    %21 = arith.subf %0, %20 : vector<8x128xf32>
    %22 = vector.broadcast %19 : vector<8x1xf32> to vector<8x128xf32>
    %23 = arith.mulf %21, %22 : vector<8x128xf32>
    %c0_7 = arith.constant 0 : index
    %c0_8 = arith.constant 0 : index
    %24 = vector.load %arg2[%c0_7, %c0_8] : memref<8x128xf32, #tpu.memory_space<vmem>>, vector<8x128xf32>
    tpu.vector_store %arg2[%c0_7, %c0_8], %23 {strides = array<i32>} : memref<8x128xf32, #tpu.memory_space<vmem>>, vector<8x128xf32>,
    return
  }
  func.func @transform_0(%arg0: i32) -> (i32, i32) {
    %c0_i32 = arith.constant 0 : i32
    %c0_i32_0 = arith.constant 0 : i32
    return %arg0, %c0_i32 : i32, i32
  }
  func.func @transform_1(%arg0: i32) -> (i32, i32) {
    %c0_i32 = arith.constant 0 : i32
    %c0_i32_0 = arith.constant 0 : i32
    return %arg0, %c0_i32 : i32, i32
  }
}

</mosaic_0001>

<llo_original>
// kernel: tpu_custom_call.1
$region0: #{tpu_custom_call.1}
  #allocation0 [shape = 'u32[]', space=smem, size = 0x4, offset = 0x4, fixed_abs, tag = 'smem constant byte address 0x4 - core index']
  #allocation1 [shape = 'u32[144,128]{1,0:T(1,128)}', space=vmem, size = 0x12000, scoped, tag = 'internal scratch']
  %s0 = inlined_call_operand.hbm [shape: f32[16,128], index: 0, kind: input, shape index: {}]
  %s1 = inlined_call_operand.hbm [shape: f32[16,128], index: 1, kind: output, shape index: {}]
  %s2 = sld [smem:[#allocation0]]
  $region41: #{tpu_custom_call.1} parent=0
    _
  %s4 = ssub.s32 1, %s2
  %s5 = scalar_select 0, %s4, %s2
  $region1: #{tpu_custom_call.1} parent=0
    #allocation2 [shape = 'u8[8192]{0}', space=vmem, size = 0x2000, scoped, tag = 'input window, operand 0']
    #allocation3 [shape = 's32[2]{0}', space=sflag, size = 0x8, scoped, tag = 'scoped memory for tpu_custom_call.1']
    #allocation4 [shape = 's32[2]{0}', space=sflag, size = 0x8, scoped, tag = 'scoped memory for tpu_custom_call.1']
    #allocation5 [shape = 'u8[8192]{0}', space=vmem, size = 0x2000, scoped, tag = 'output window, operand 0']
    %6 = vsyncpa [#allocation3], 0
    %s7 = scalar_lea.sflag [#allocation3], 1
    %8 = vsyncpa %s7, 0
    %9 = vsyncpa [#allocation4], 0
    %s10 = scalar_lea.sflag [#allocation4], 1
    %11 = vsyncpa %s10, 0
    loop: start=0, step=1, limit=4
    $region2: #{tpu_custom_call.1} parent=1 // loop_pre_header
      _
    $region3: #{tpu_custom_call.1} parent=1 // loop_header
      %s13 = sphi 0, %s17
      %p14 = scmp.ge.s32.totalorder %s13, 4
      %s23 = sphi 0, %s25
      %s26 = sphi 0, %s23
      %s27 = sphi 0, %s26
      %s43 = sphi 0, %s27
      %s49 = sphi 0, %s51
      %s52 = sphi 0, %s49
      %s53 = sphi 0, %s52
      %s69 = sphi 0, %s53
    $region4: #{tpu_custom_call.1} parent=1 // loop_header_branch
      %16 = sbr.rel (%p14) target = $region8
    $region5: #{tpu_custom_call.1} parent=1 // loop_body
      %s18 = ssub.s32 %s13, 1
      %s19 = ssub.s32 %s13, 2
      %s20 = sadd.s32 %s13, 1
      %s21 = ssub.s32 %s13, %s20
      %p22 = scmp.eq.s32.totalorder %s21, 0
      %s24 = sadd.s32 %s23, 1
      %s25 = scalar_select %p22, %s23, %s24
      %p28 = pneg %p22
      %p29 = scmp.eq.s32.totalorder %s13, 1
      %p30 = por %p28, %p29
      %p31 = scmp.ne.s32.totalorder %s23, %s26
      %p32 = scmp.eq.s32.totalorder %s13, 0
      %p33 = por %p31, %p32
      %p34 = scmp.ne.s32.totalorder %s23, %s26
      %p35 = scmp.eq.s32.totalorder %s18, 1
      %p36 = por %p34, %p35
      %p37 = scmp.ne.s32.totalorder %s26, %s27
      %p38 = scmp.eq.s32.totalorder %s18, 0
      %p39 = por %p37, %p38
      %p40 = scmp.ne.s32.totalorder %s26, %s27
      %p41 = scmp.eq.s32.totalorder %s19, 1
      %p42 = por %p40, %p41
      %p44 = scmp.ne.s32.totalorder %s27, %s43
      %p45 = scmp.eq.s32.totalorder %s19, 0
      %p46 = por %p44, %p45
      %s47 = ssub.s32 %s13, %s20
      %p48 = scmp.eq.s32.totalorder %s47, 0
      %s50 = sadd.s32 %s49, 1
      %s51 = scalar_select %p48, %s49, %s50
      %p54 = pneg %p48
      %p55 = scmp.eq.s32.totalorder %s13, 1
      %p56 = por %p54, %p55
      %p57 = scmp.ne.s32.totalorder %s49, %s52
      %p58 = scmp.eq.s32.totalorder %s13, 0
      %p59 = por %p57, %p58
      %p60 = scmp.ne.s32.totalorder %s49, %s52
      %p61 = scmp.eq.s32.totalorder %s18, 1
      %p62 = por %p60, %p61
      %p63 = scmp.ne.s32.totalorder %s52, %s53
      %p64 = scmp.eq.s32.totalorder %s18, 0
      %p65 = por %p63, %p64
      %p66 = scmp.ne.s32.totalorder %s52, %s53
      %p67 = scmp.eq.s32.totalorder %s19, 1
      %p68 = por %p66, %p67
      %p70 = scmp.ne.s32.totalorder %s53, %s69
      %p71 = scmp.eq.s32.totalorder %s19, 0
      %p72 = por %p70, %p71
      %p73 = scmp.le.s32.totalorder 1, %s13
      %p74 = scmp.lt.s32.totalorder %s13, 3
      %p75 = pnand %p73, %p74
      %p76 = pneg %p75
      // Predicated region
      $region9: #{tpu_custom_call.1} parent=5 // pred_check
        _
      $region10: #{tpu_custom_call.1} parent=5 // pred_check_branch
        %78 = sbr.rel (%p75) target = $region12
      $region11: #{tpu_custom_call.1} parent=5 // pred_region
        %s79 = ssub.s32 %s13, 1
      $region12: #{tpu_custom_call.1} parent=5 // pred_fallthru
        _
      %p80 = scmp.lt.s32.totalorder %s13, 2
      // Predicated region
      $region13: #{tpu_custom_call.1} parent=5 // pred_check
        %p81 = pneg %p80
      $region14: #{tpu_custom_call.1} parent=5 // pred_check_branch
        %83 = sbr.rel (%p81) target = $region16
      $region15: #{tpu_custom_call.1} parent=5 // pred_region
        // Predicated region
        $region17: #{tpu_custom_call.1} parent=15 // pred_check
          %p84 = pneg %p33
        $region18: #{tpu_custom_call.1} parent=15 // pred_check_branch
          %86 = sbr.rel (%p84) target = $region20
        $region19: #{tpu_custom_call.1} parent=15 // pred_region
          %s87 = sand.u32 %s23, 1
          %s88 = scalar_lea.sflag [#allocation3], %s87
          %s89 = sand.u32 %s23, 1
          %s90 = smul.addr %s89, 8
          %s91 = scalar_lea.vmem [#allocation2], %s90
          %s93 = ssub.s32 128, 128
          %94 = vsyncadd %s88, %s93
          %s95 = smul.addr %s13, 128
          %s96 = scalar_lea.hbm %s0, %s95
          %s98 = sshll.u32 %s91, 4
          %s99 = int_to_ptr.vmem [resolvable:$true] %s98
          %101 = dma.hbm_to_vmem [thread:$0]  %s96, 128, %s99, %s88
        $region20: #{tpu_custom_call.1} parent=15 // pred_fallthru
          _
      $region16: #{tpu_custom_call.1} parent=5 // pred_fallthru
        _
      %p102 = scmp.le.s32.totalorder 1, %s13
      %p103 = scmp.lt.s32.totalorder %s13, 3
      %p104 = pnand %p102, %p103
      %p105 = pneg %p104
      // Predicated region
      $region21: #{tpu_custom_call.1} parent=5 // pred_check
        _
      $region22: #{tpu_custom_call.1} parent=5 // pred_check_branch
        %107 = sbr.rel (%p104) target = $region24
      $region23: #{tpu_custom_call.1} parent=5 // pred_region
        %s108 = ssub.s32 %s13, 1
        %s109 = sand.u32 %s26, 1
        %s110 = scalar_lea.sflag [#allocation3], %s109
        %s111 = sand.u32 %s26, 1
        %s112 = smul.addr %s111, 8
        %s113 = scalar_lea.vmem [#allocation2], %s112
        // Predicated region
        $region25: #{tpu_custom_call.1} parent=23 // pred_check
          %p114 = pneg %p39
        $region26: #{tpu_custom_call.1} parent=23 // pred_check_branch
          %116 = sbr.rel (%p114) target = $region28
        $region27: #{tpu_custom_call.1} parent=23 // pred_region
          %117 = dma.done %s110, 128
        $region28: #{tpu_custom_call.1} parent=23 // pred_fallthru
          _
        %s118 = sand.u32 %s26, 1
        %s119 = scalar_lea.sflag [#allocation3], %s118
        %s120 = sand.u32 %s26, 1
        %s121 = smul.addr %s120, 8
        %s122 = scalar_lea.vmem [#allocation2], %s121
        %p123 = pneg %p39
        %p124 = pneg %p36
        %p125 = pneg %p65
        %p126 = pneg %p62
        %s127 = sand.u32 %s52, 1
        %s128 = scalar_lea.sflag [#allocation4], %s127
        %s129 = sand.u32 %s52, 1
        %s130 = smul.addr %s129, 8
        %s131 = scalar_lea.vmem [#allocation5], %s130
        %v132 = vld [vmem:[%s113] sm:$0xff]
        %133 = vadd.xlane.f32.xlu0 %v132
        %v134 = vpop.xlane.xlu0 %133
        %v135 = vmul.f32 %v132, %v132
        %136 = vadd.xlane.f32.xlu0 %v135
        %v137 = vpop.xlane.xlu0 %136
        %v138 = vmul.f32 %v134, 0.0078125
        %v139 = vmul.f32 %v134, %v134
        %v140 = vmul.f32 %v139, 0.0078125
        %v141 = vsub.f32 %v137, %v140
        %v142 = vmul.f32 %v141, 0.007874016
        %v143 = vmax.f32 %v142, 0.0
        %v144 = vrsqrt.pop %v143
        %v145 = vmul.f32 %v143, %v144
        %vm146 = vcmp.eq.f32.partialorder %v143, inf
        %v147 = vsel %vm146, %v143, %v145
        %vm148 = vcmp.eq.f32.partialorder %v143, 0.0
        %v149 = vand.u32 %v143, 2147483648
        %v150 = vsel %vm148, %v149, %v147
        %v151 = vadd.f32 %v150, 1e-05
        %v152 = vrcp.pop %v151
        %v153 = vsub.f32 %v132, %v138
        %v154 = vmul.f32 %v153, %v152
        %155 = vst [vmem:[%s131] sm:$0xff] %v154
        %s156 = sand.u32 %s52, 1
        %s157 = scalar_lea.sflag [#allocation4], %s156
        %s158 = sand.u32 %s52, 1
        %s159 = smul.addr %s158, 8
        %s160 = scalar_lea.vmem [#allocation5], %s159
        // Predicated region
        $region29: #{tpu_custom_call.1} parent=23 // pred_check
          %p161 = pneg %p62
        $region30: #{tpu_custom_call.1} parent=23 // pred_check_branch
          %163 = sbr.rel (%p161) target = $region32
        $region31: #{tpu_custom_call.1} parent=23 // pred_region
          %s165 = ssub.s32 128, 128
          %166 = vsyncadd %s157, %s165
          %s167 = smul.addr %s18, 128
          %s168 = scalar_lea.hbm %s1, %s167
          %s170 = sshll.u32 %s160, 4
          %s171 = int_to_ptr.vmem [resolvable:$true] %s170
          %173 = dma.vmem_to_hbm [thread:$0]  %s171, 128, %s168, %s157
        $region32: #{tpu_custom_call.1} parent=23 // pred_fallthru
          _
      $region24: #{tpu_custom_call.1} parent=5 // pred_fallthru
        _
      %p174 = scmp.le.s32.totalorder 2, %s13
      // Predicated region
      $region33: #{tpu_custom_call.1} parent=5 // pred_check
        %p175 = pneg %p174
      $region34: #{tpu_custom_call.1} parent=5 // pred_check_branch
        %177 = sbr.rel (%p175) target = $region36
      $region35: #{tpu_custom_call.1} parent=5 // pred_region
        %s178 = ssub.s32 %s13, 2
        // Predicated region
        $region37: #{tpu_custom_call.1} parent=35 // pred_check
          %p179 = pneg %p68
        $region38: #{tpu_custom_call.1} parent=35 // pred_check_branch
          %181 = sbr.rel (%p179) target = $region40
        $region39: #{tpu_custom_call.1} parent=35 // pred_region
          %s182 = sand.u32 %s53, 1
          %s183 = scalar_lea.sflag [#allocation4], %s182
          %s184 = sand.u32 %s53, 1
          %s185 = smul.addr %s184, 8
          %s186 = scalar_lea.vmem [#allocation5], %s185
          %187 = dma.done %s183, 128
        $region40: #{tpu_custom_call.1} parent=35 // pred_fallthru
          _
      $region36: #{tpu_custom_call.1} parent=5 // pred_fallthru
        _
    $region6: #{tpu_custom_call.1} parent=1 // loop_footer
      %s17 = sadd.s32 1, %s13
    $region7: #{tpu_custom_call.1} parent=1 // loop_footer_branch
      %12 = sbr.rel target = $region3
    $region8: #{tpu_custom_call.1} parent=1 // loop_exit
      _
    %188 = vsyncpa [#allocation3], 1
    %s189 = scalar_lea.sflag [#allocation3], 1
    %190 = vsyncpa %s189, 1
    %191 = vsyncpa [#allocation4], 1
    %s192 = scalar_lea.sflag [#allocation4], 1
    %193 = vsyncpa %s192, 1

</llo_original>
